<compile_context>
chip_gen: v5e
topology: v5e:2x2
jax: 0.10.0
libtpu: 0.0.40
codegen_flags: <defaults>
</compile_context>

<pallas_src>
import math

import jax
import jax.numpy as jnp
from jax.experimental import pallas as pl
from jax.experimental.pallas import tpu as pltpu


def _dirproj_kernel(v_ref, w_ref, wt_ref, b_ref, o_ref):
    # v_ref : (3, TM, Dv)  direction-major view of the input rows
    # w_ref : (3, Dv)      direction weights (PyTorch w, transposed)
    # wt_ref: (Dv, Df)     linear weight, transposed (so out = vp @ wt + b)
    # b_ref : (1, Df)      linear bias
    # o_ref : (TM, Df)
    vp = (v_ref[0] * w_ref[0:1, :]
          + v_ref[1] * w_ref[1:2, :]
          + v_ref[2] * w_ref[2:3, :])                      # (TM, Dv) on the VPU
    acc = jnp.dot(vp, wt_ref[...],
                  preferred_element_type=jnp.float32)      # (TM, Df) on the MXU
    o_ref[...] = (acc + b_ref[...]).astype(o_ref.dtype)


def direction_proj_linear_vector(v: jax.Array,
                                 w: jax.Array,
                                 lin_w: jax.Array,
                                 lin_b: jax.Array,
                                 *,
                                 block_rows: int = 256) -> jax.Array:
    """Pallas equivalent of DirectionProjLinearVector.forward(v).

    v:     (..., d_v, 3)
    w:     (d_v, 3)          direction-projection weights
    lin_w: (d_f, d_v)        nn.Linear weight
    lin_b: (d_f,)            nn.Linear bias
    returns (..., d_f)
    """
    *lead, d_v, n_dir = v.shape
    assert n_dir == 3, f"last dim of v must be 3 (got {n_dir})"
    assert w.shape == (d_v, 3)
    d_f, d_v2 = lin_w.shape
    assert d_v2 == d_v and lin_b.shape == (d_f,)

    n_rows = math.prod(lead) if lead else 1

    # Layout plumbing: put the size-3 direction axis first so the last two
    # dims of every block are (rows, d_v) — lane-dense on the TPU vreg.
    v3 = jnp.transpose(v.reshape(n_rows, d_v, 3), (2, 0, 1))   # (3, N, d_v)
    w3 = w.T                                                   # (3, d_v)
    wt = lin_w.T                                               # (d_v, d_f)
    b2 = lin_b.reshape(1, d_f)                                 # (1, d_f)

    tm = min(block_rows, n_rows)
    pad = (-n_rows) % tm
    if pad:
        v3 = jnp.pad(v3, ((0, 0), (0, pad), (0, 0)))
    n_rows_p = n_rows + pad
    grid = (n_rows_p // tm,)

    out = pl.pallas_call(
        _dirproj_kernel,
        out_shape=jax.ShapeDtypeStruct((n_rows_p, d_f), v.dtype),
        grid=grid,
        in_specs=[
            pl.BlockSpec((3, tm, d_v), lambda i: (0, i, 0)),   # v3 row-tile
            pl.BlockSpec((3, d_v), lambda i: (0, 0)),          # dir weights
            pl.BlockSpec((d_v, d_f), lambda i: (0, 0)),        # linear weight^T
            pl.BlockSpec((1, d_f), lambda i: (0, 0)),          # bias
        ],
        out_specs=pl.BlockSpec((tm, d_f), lambda i: (i, 0)),
        compiler_params=pltpu.CompilerParams(
            dimension_semantics=("parallel",),
        ),
    )(v3, w3, wt, b2)

    out = out[:n_rows]
    return out.reshape(*lead, d_f) if lead else out.reshape(d_f)


if __name__ == "__main__":
    # Small, lane-friendly config: batch=2, seq=8, d_v=128, d_f=128.
    batch, seq = 2, 8
    d_v, d_f = 128, 128

    key = jax.random.PRNGKey(0)
    kv, kw, klw, klb = jax.random.split(key, 4)
    v = jax.random.normal(kv, (batch, seq, d_v, 3), dtype=jnp.float32)
    w = jax.random.normal(kw, (d_v, 3), dtype=jnp.float32)
    lin_w = jax.random.normal(klw, (d_f, d_v), dtype=jnp.float32) * 0.05
    lin_b = jax.random.normal(klb, (d_f,), dtype=jnp.float32) * 0.05

    out = direction_proj_linear_vector(v, w, lin_w, lin_b)
    out = jax.block_until_ready(out)

    # Pure-JAX reference of the PyTorch forward.
    v_proj = (v * w).sum(axis=-1)          # (B, S, d_v)
    ref = v_proj @ lin_w.T + lin_b         # (B, S, d_f)

    assert out.shape == ref.shape
    assert out.dtype == ref.dtype
    max_err = float(jnp.max(jnp.abs(out - ref)))
    assert bool(jnp.allclose(out, ref, rtol=2e-2, atol=1e-1)), max_err

    print("KERNEL_OK")
</pallas_src>

<mosaic_0001>
module attributes {stable_mosaic.version = 11 : i64} {
  func.func @_dirproj_kernel(%arg0: i32, %arg1: memref<3x16x128xf32, #tpu.memory_space<vmem>>, %arg2: memref<3x128xf32, #tpu.memory_space<vmem>>, %arg3: memref<128x128xf32, #tpu.memory_space<vmem>>, %arg4: memref<1x128xf32, #tpu.memory_space<vmem>>, %arg5: memref<16x128xf32, #tpu.memory_space<vmem>>) attributes {dimension_semantics = [#tpu.dimension_semantics<parallel>], iteration_bounds = array<i64: 1>, scalar_prefetch = 0 : i64, scratch_operands = 0 : i64, tpu.core_type = #tpu.core_type<tc>, window_params = [{transform_indices = @transform_0, window_bounds = array<i64: 3, 16, 128>}, {pipeline_mode = #tpu.pipeline_mode<synchronous>, transform_indices = @transform_1, window_bounds = array<i64: 3, 128>}, {pipeline_mode = #tpu.pipeline_mode<synchronous>, transform_indices = @transform_2, window_bounds = array<i64: 128, 128>}, {pipeline_mode = #tpu.pipeline_mode<synchronous>, transform_indices = @transform_3, window_bounds = array<i64: 1, 128>}, {transform_indices = @transform_4, window_bounds = array<i64: 16, 128>}]} {
    %c0 = arith.constant 0 : index
    %c0_0 = arith.constant 0 : index
    %c0_1 = arith.constant 0 : index
    %0 = vector.load %arg1[%c0, %c0_0, %c0_1] : memref<3x16x128xf32, #tpu.memory_space<vmem>>, vector<1x16x128xf32>
    %1 = vector.shape_cast %0 : vector<1x16x128xf32> to vector<16x128xf32>
    %c0_2 = arith.constant 0 : index
    %c0_3 = arith.constant 0 : index
    %2 = vector.load %arg2[%c0_2, %c0_3] : memref<3x128xf32, #tpu.memory_space<vmem>>, vector<1x128xf32>
    %3 = vector.broadcast %2 : vector<1x128xf32> to vector<16x128xf32>
    %4 = arith.mulf %1, %3 : vector<16x128xf32>
    %c1 = arith.constant 1 : index
    %c0_4 = arith.constant 0 : index
    %c0_5 = arith.constant 0 : index
    %5 = vector.load %arg1[%c1, %c0_4, %c0_5] : memref<3x16x128xf32, #tpu.memory_space<vmem>>, vector<1x16x128xf32>
    %6 = vector.shape_cast %5 : vector<1x16x128xf32> to vector<16x128xf32>
    %c1_6 = arith.constant 1 : index
    %c0_7 = arith.constant 0 : index
    %7 = vector.load %arg2[%c1_6, %c0_7] : memref<3x128xf32, #tpu.memory_space<vmem>>, vector<1x128xf32>
    %8 = vector.broadcast %7 : vector<1x128xf32> to vector<16x128xf32>
    %9 = arith.mulf %6, %8 : vector<16x128xf32>
    %10 = arith.addf %4, %9 : vector<16x128xf32>
    %c2 = arith.constant 2 : index
    %c0_8 = arith.constant 0 : index
    %c0_9 = arith.constant 0 : index
    %11 = vector.load %arg1[%c2, %c0_8, %c0_9] : memref<3x16x128xf32, #tpu.memory_space<vmem>>, vector<1x16x128xf32>
    %12 = vector.shape_cast %11 : vector<1x16x128xf32> to vector<16x128xf32>
    %c2_10 = arith.constant 2 : index
    %c0_11 = arith.constant 0 : index
    %13 = vector.load %arg2[%c2_10, %c0_11] : memref<3x128xf32, #tpu.memory_space<vmem>>, vector<1x128xf32>
    %14 = vector.broadcast %13 : vector<1x128xf32> to vector<16x128xf32>
    %15 = arith.mulf %12, %14 : vector<16x128xf32>
    %16 = arith.addf %10, %15 : vector<16x128xf32>
    %c0_12 = arith.constant 0 : index
    %c0_13 = arith.constant 0 : index
    %17 = vector.load %arg3[%c0_12, %c0_13] : memref<128x128xf32, #tpu.memory_space<vmem>>, vector<128x128xf32>
    %cst = arith.constant dense<0.000000e+00> : vector<16x128xf32>
    %18 = tpu.matmul %16, %17, %cst {dimension_numbers = #tpu.dot_dimension_numbers<[1], [0], [0], [1], [0, 0, 1, 1], [], []>} : vector<16x128xf32>, vector<128x128xf32>, vector<16x128xf32> -> vector<16x128xf32>
    %c0_14 = arith.constant 0 : index
    %c0_15 = arith.constant 0 : index
    %19 = vector.load %arg4[%c0_14, %c0_15] : memref<1x128xf32, #tpu.memory_space<vmem>>, vector<1x128xf32>
    %20 = vector.broadcast %19 : vector<1x128xf32> to vector<16x128xf32>
    %21 = arith.addf %18, %20 : vector<16x128xf32>
    %c0_16 = arith.constant 0 : index
    %c0_17 = arith.constant 0 : index
    %22 = vector.load %arg5[%c0_16, %c0_17] : memref<16x128xf32, #tpu.memory_space<vmem>>, vector<16x128xf32>
    tpu.vector_store %arg5[%c0_16, %c0_17], %21 {strides = array<i32>} : memref<16x128xf32, #tpu.memory_space<vmem>>, vector<16x128xf32>,
    return
  }
  func.func @transform_0(%arg0: i32) -> (i32, i32, i32) {
    %c0_i32 = arith.constant 0 : i32
    %c0_i32_0 = arith.constant 0 : i32
    %c0_i32_1 = arith.constant 0 : i32
    return %c0_i32, %arg0, %c0_i32_0 : i32, i32, i32
  }
  func.func @transform_1(%arg0: i32) -> (i32, i32) {
    %c0_i32 = arith.constant 0 : i32
    %c0_i32_0 = arith.constant 0 : i32
    %c0_i32_1 = arith.constant 0 : i32
    return %c0_i32, %c0_i32_0 : i32, i32
  }
  func.func @transform_2(%arg0: i32) -> (i32, i32) {
    %c0_i32 = arith.constant 0 : i32
    %c0_i32_0 = arith.constant 0 : i32
    %c0_i32_1 = arith.constant 0 : i32
    return %c0_i32, %c0_i32_0 : i32, i32
  }
  func.func @transform_3(%arg0: i32) -> (i32, i32) {
    %c0_i32 = arith.constant 0 : i32
    %c0_i32_0 = arith.constant 0 : i32
    %c0_i32_1 = arith.constant 0 : i32
    return %c0_i32, %c0_i32_0 : i32, i32
  }
  func.func @transform_4(%arg0: i32) -> (i32, i32) {
    %c0_i32 = arith.constant 0 : i32
    %c0_i32_0 = arith.constant 0 : i32
    return %arg0, %c0_i32 : i32, i32
  }
}

</mosaic_0001>

<llo_original>
// kernel: tpu_custom_call.1
$region0: #{tpu_custom_call.1}
  #allocation0 [shape = 'u32[]', space=smem, size = 0x4, offset = 0x4, fixed_abs, tag = 'smem constant byte address 0x4 - core index']
  #allocation1 [shape = 'u32[72,128]{1,0:T(1,128)}', space=vmem, size = 0x9000, scoped, tag = 'internal scratch']
  %s0 = inlined_call_operand.hbm [shape: f32[3,16,128], index: 0, kind: input, shape index: {}]
  %s1 = inlined_call_operand.hbm [shape: f32[3,128], index: 1, kind: input, shape index: {}]
  %s2 = inlined_call_operand.hbm [shape: f32[128,128], index: 2, kind: input, shape index: {}]
  %s3 = inlined_call_operand.vmem [shape: f32[1,128], index: 3, kind: input, shape index: {}]
  %s4 = inlined_call_operand.hbm [shape: f32[16,128], index: 4, kind: output, shape index: {}]
  %s5 = sld [smem:[#allocation0]]
  $region38: #{tpu_custom_call.1} parent=0
    _
  %s7 = ssub.s32 1, %s5
  %s8 = scalar_select 0, %s7, %s5
  $region1: #{tpu_custom_call.1} parent=0
    #allocation2 [shape = 'u8[24576]{0}', space=vmem, size = 0x6000, scoped, tag = 'input window, operand 0, single buffered']
    #allocation3 [shape = 's32[1]{0}', space=sflag, size = 0x4, scoped, tag = 'scoped memory for tpu_custom_call.1']
    #allocation4 [shape = 's32[1]{0}', space=sflag, size = 0x4, scoped, tag = 'scoped memory for tpu_custom_call.1']
    #allocation5 [shape = 'u8[2048]{0}', space=vmem, size = 0x800, scoped, tag = 'input window, operand 1, single buffered']
    #allocation6 [shape = 's32[1]{0}', space=sflag, size = 0x4, scoped, tag = 'scoped memory for tpu_custom_call.1']
    #allocation7 [shape = 'u8[65536]{0}', space=vmem, size = 0x10000, scoped, tag = 'input window, operand 2, single buffered']
    #allocation8 [shape = 'u8[8192]{0}', space=vmem, size = 0x2000, scoped, tag = 'output window, operand 0, single buffered']
    %9 = vsyncpa [#allocation3], 0
    %10 = vsyncpa [#allocation6], 0
    %11 = vsyncpa [#allocation4], 0
    // Predicated region
    $region2: #{tpu_custom_call.1} parent=1 // pred_check
      _
    $region3: #{tpu_custom_call.1} parent=1 // pred_check_branch
      %13 = sbr.rel (0) target = $region5
    $region4: #{tpu_custom_call.1} parent=1 // pred_region
      %15 = vsyncadd [#allocation3], 0
      %s16 = sshll.u32 %s0, 4
      %s17 = int_to_ptr.hbm [resolvable:$true] %s16
      %s18 = sshll.u32 [#allocation2], 4
      %s19 = int_to_ptr.vmem [resolvable:$true] %s18
      %24 = dma.hbm_to_vmem [thread:$0]  %s17, 768, %s19, [#allocation3], 128, 128, 8
    $region5: #{tpu_custom_call.1} parent=1 // pred_fallthru
      _
    // Predicated region
    $region6: #{tpu_custom_call.1} parent=1 // pred_check
      _
    $region7: #{tpu_custom_call.1} parent=1 // pred_check_branch
      %26 = sbr.rel (0) target = $region9
    $region8: #{tpu_custom_call.1} parent=1 // pred_region
      %28 = vsyncadd [#allocation6], 0
      %s30 = sshll.u32 %s1, 4
      %s31 = int_to_ptr.hbm [resolvable:$true] %s30
      %s32 = sshll.u32 [#allocation5], 4
      %s33 = int_to_ptr.vmem [resolvable:$true] %s32
      %35 = dma.hbm_to_vmem [thread:$0]  %s31, 64, %s33, [#allocation6]
    $region9: #{tpu_custom_call.1} parent=1 // pred_fallthru
      _
    // Predicated region
    $region10: #{tpu_custom_call.1} parent=1 // pred_check
      _
    $region11: #{tpu_custom_call.1} parent=1 // pred_check_branch
      %37 = sbr.rel (0) target = $region13
    $region12: #{tpu_custom_call.1} parent=1 // pred_region
      %39 = vsyncadd [#allocation6], 0
      %s40 = sshll.u32 %s2, 4
      %s41 = int_to_ptr.hbm [resolvable:$true] %s40
      %s42 = sshll.u32 [#allocation7], 4
      %s43 = int_to_ptr.vmem [resolvable:$true] %s42
      %48 = dma.hbm_to_vmem [thread:$0]  %s41, 2048, %s43, [#allocation6], 128, 128, 8
    $region13: #{tpu_custom_call.1} parent=1 // pred_fallthru
      _
    // Predicated region
    $region14: #{tpu_custom_call.1} parent=1 // pred_check
      _
    $region15: #{tpu_custom_call.1} parent=1 // pred_check_branch
      %50 = sbr.rel (0) target = $region17
    $region16: #{tpu_custom_call.1} parent=1 // pred_region
      _
    $region17: #{tpu_custom_call.1} parent=1 // pred_fallthru
      _
    // Predicated region
    $region18: #{tpu_custom_call.1} parent=1 // pred_check
      _
    $region19: #{tpu_custom_call.1} parent=1 // pred_check_branch
      %52 = sbr.rel (0) target = $region21
    $region20: #{tpu_custom_call.1} parent=1 // pred_region
      %54 = dma.done [#allocation3], 768
    $region21: #{tpu_custom_call.1} parent=1 // pred_fallthru
      _
    // Predicated region
    $region22: #{tpu_custom_call.1} parent=1 // pred_check
      _
    $region23: #{tpu_custom_call.1} parent=1 // pred_check_branch
      %56 = sbr.rel (0) target = $region25
    $region24: #{tpu_custom_call.1} parent=1 // pred_region
      %58 = dma.done [#allocation6], 64
    $region25: #{tpu_custom_call.1} parent=1 // pred_fallthru
      _
    // Predicated region
    $region26: #{tpu_custom_call.1} parent=1 // pred_check
      _
    $region27: #{tpu_custom_call.1} parent=1 // pred_check_branch
      %60 = sbr.rel (0) target = $region29
    $region28: #{tpu_custom_call.1} parent=1 // pred_region
      %62 = dma.done [#allocation6], 2048
    $region29: #{tpu_custom_call.1} parent=1 // pred_fallthru
      _
    %v63 = vld [vmem:[#allocation2] sm:$0xff]
    %v64 = vld [vmem:[#allocation2 + $0x8] sm:$0xff]
    %v65 = vld [vmem:[#allocation5] sm:$0x1]
    %v66 = vperm.slane %v65, 0
    %v67 = vmul.f32 %v63, %v66
    %v68 = vmul.f32 %v64, %v66
    %s69 = scalar_lea.vmem [#allocation2], 16
    %v70 = vld [vmem:[%s69] sm:$0xff]
    %v71 = vld [vmem:[%s69 + $0x8] sm:$0xff]
    %v72 = vld [vmem:[#allocation5 + $0x1] sm:$0x1]
    %v73 = vperm.slane %v72, 0
    %v74 = vmul.f32 %v70, %v73
    %v75 = vmul.f32 %v71, %v73
    %v76 = vadd.f32 %v67, %v74
    %v77 = vadd.f32 %v68, %v75
    %s78 = scalar_lea.vmem [#allocation2], 32
    %v79 = vld [vmem:[%s78] sm:$0xff]
    %v80 = vld [vmem:[%s78 + $0x8] sm:$0xff]
    %v81 = vld [vmem:[#allocation5 + $0x2] sm:$0x1]
    %v82 = vperm.slane %v81, 0
    %v83 = vmul.f32 %v79, %v82
    %v84 = vmul.f32 %v80, %v82
    %v85 = vadd.f32 %v76, %v83
    %v86 = vadd.f32 %v77, %v84
    %v87 = vld [vmem:[#allocation7] sm:$0xff]
    %v88 = vld [vmem:[#allocation7 + $0x8] sm:$0xff]
    %v89 = vld [vmem:[#allocation7 + $0x10] sm:$0xff]
    %v90 = vld [vmem:[#allocation7 + $0x18] sm:$0xff]
    %v91 = vld [vmem:[#allocation7 + $0x20] sm:$0xff]
    %v92 = vld [vmem:[#allocation7 + $0x28] sm:$0xff]
    %v93 = vld [vmem:[#allocation7 + $0x30] sm:$0xff]
    %v94 = vld [vmem:[#allocation7 + $0x38] sm:$0xff]
    %v95 = vld [vmem:[#allocation7 + $0x40] sm:$0xff]
    %v96 = vld [vmem:[#allocation7 + $0x48] sm:$0xff]
    %v97 = vld [vmem:[#allocation7 + $0x50] sm:$0xff]
    %v98 = vld [vmem:[#allocation7 + $0x58] sm:$0xff]
    %v99 = vld [vmem:[#allocation7 + $0x60] sm:$0xff]
    %v100 = vld [vmem:[#allocation7 + $0x68] sm:$0xff]
    %v101 = vld [vmem:[#allocation7 + $0x70] sm:$0xff]
    %v102 = vld [vmem:[#allocation7 + $0x78] sm:$0xff]
    %v103 = vld [vmem:[%s3] sm:$0x1]
    %v105 = vperm.slane %v103, 0
    %107 = vmatpush.msra.mxu0 %v102
    %108 = vmatpush.msra.mxu0 %v101
    %109 = vmatpush.msra.mxu0 %v100
    %110 = vmatpush.msra.mxu0 %v99
    %111 = vmatpush.msra.mxu0 %v98
    %112 = vmatpush.msra.mxu0 %v97
    %113 = vmatpush.msra.mxu0 %v96
    %114 = vmatpush.msra.mxu0 %v95
    %115 = vmatpush.msra.mxu0 %v94
    %116 = vmatpush.msra.mxu0 %v93
    %117 = vmatpush.msra.mxu0 %v92
    %118 = vmatpush.msra.mxu0 %v91
    %119 = vmatpush.msra.mxu0 %v90
    %120 = vmatpush.msra.mxu0 %v89
    %121 = vmatpush.msra.mxu0 %v88
    %122 = vmatpush.msra.mxu0 %v87
    %123 = vmatmul.f32.gmra.mxu0 %v85
    %v124 = vpop.f32.mrf.mxu0
    %v125 = vadd.f32 %v105, %v124
    %126 = vmatmul.f32.gmra.mxu0 %v86
    %v127 = vpop.f32.mrf.mxu0
    %v128 = vadd.f32 %v105, %v127
    %129 = vdwg.mxu0
    %130 = vst [vmem:[#allocation8] sm:$0xff] %v125
    %131 = vst [vmem:[#allocation8 + $0x8] sm:$0xff] %v128
    // Predicated region
    $region30: #{tpu_custom_call.1} parent=1 // pred_check
      _
    $region31: #{tpu_custom_call.1} parent=1 // pred_check_branch
      %133 = sbr.rel (0) target = $region33
    $region32: #{tpu_custom_call.1} parent=1 // pred_region
      %135 = vsyncadd [#allocation4], 0
      %s136 = sshll.u32 [#allocation8], 4
      %s137 = int_to_ptr.vmem [resolvable:$true] %s136
      %s138 = sshll.u32 %s4, 4
      %s139 = int_to_ptr.hbm [resolvable:$true] %s138
      %144 = dma.vmem_to_hbm [thread:$0]  %s137, 256, %s139, [#allocation4], 128, 128, 8
    $region33: #{tpu_custom_call.1} parent=1 // pred_fallthru
      _
    // Predicated region
    $region34: #{tpu_custom_call.1} parent=1 // pred_check
      _
    $region35: #{tpu_custom_call.1} parent=1 // pred_check_branch
      %146 = sbr.rel (0) target = $region37
    $region36: #{tpu_custom_call.1} parent=1 // pred_region
      %148 = dma.done [#allocation4], 256
    $region37: #{tpu_custom_call.1} parent=1 // pred_fallthru
      _
    %149 = vsyncpa [#allocation3], 1
    %150 = vsyncpa [#allocation6], 1
    %151 = vsyncpa [#allocation4], 1

</llo_original>
